<compile_context>
chip_gen: v6e
topology: v6e:2x2x1
jax: 0.10.0
libtpu: 0.0.40
codegen_flags: <defaults>
</compile_context>

<pallas_src>
import jax
import jax.numpy as jnp
from jax import lax
from jax.experimental import pallas as pl
from jax.experimental.pallas import tpu as pltpu

_POWER = 0.2
_LANE = 128
_BLOCK_ROWS = 512          # sublanes per block: 512 x 128 x f32 = 256 KiB
_NUM_SHARDS = 2            # split the reduction across TensorCores (v7x megacore)


def _sparsity_kernel(x_ref, o_ref, acc_ref, *, n, steps):
    c = pl.program_id(0)   # shard (parallel axis -> one per TensorCore on v7x)
    i = pl.program_id(1)   # reduction step within the shard (arbitrary axis)

    @pl.when(i == 0)
    def _():
        acc_ref[...] = jnp.zeros_like(acc_ref)

    # Mask with *logical* (unclamped) global element indices so that
    #   (a) the ragged last block's undefined rows/lanes and
    #   (b) duplicated clamped blocks on the last shard
    # contribute exactly zero.  (int32 index math: fine for < 2^31 elements.)
    logical_block = c * steps + i
    base = logical_block * (_BLOCK_ROWS * _LANE)
    row_ids = lax.broadcasted_iota(jnp.int32, (_BLOCK_ROWS, _LANE), 0)
    lane_ids = lax.broadcasted_iota(jnp.int32, (_BLOCK_ROWS, _LANE), 1)
    elem_idx = base + row_ids * _LANE + lane_ids
    mask = elem_idx < n

    x = x_ref[...].astype(jnp.float32)        # in-kernel cast (VPU; free slack here)
    x = jnp.where(mask, x, 0.0)
    acc_ref[...] += jnp.power(jnp.abs(x), _POWER)   # lane-wise partial sums only

    @pl.when(i == steps - 1)
    def _():
        # Single cross-sublane reduce in the epilogue; lane-dense (1, 128) store.
        o_ref[...] = jnp.sum(acc_ref[...], axis=0, keepdims=True)


def sparsity_loss(weights: jax.Array) -> jax.Array:
    """mean(|weights| ** 0.2) — matches SparsityLoss.forward (L1 vs zeros, mean)."""
    n = int(weights.size)
    if n == 0:
        return jnp.zeros((), jnp.float32)

    flat = jnp.ravel(weights)                 # free bitcast; keep original dtype (f32/bf16)
    rem = n % _LANE
    if rem:
        # Only when the flat size is not lane-aligned (pads < 128 elements); the
        # in-kernel mask ignores the padded slots, so the pad value is irrelevant.
        flat = jnp.pad(flat, (0, _LANE - rem))
    rows = flat.size // _LANE
    x2d = flat.reshape(rows, _LANE)

    nblocks = pl.cdiv(rows, _BLOCK_ROWS)
    shards = _NUM_SHARDS if nblocks >= _NUM_SHARDS else 1
    steps = pl.cdiv(nblocks, shards)

    def in_map(c, i):
        # Clamp so the DMA never starts past the array; duplicated reads on the last
        # shard are masked out inside the kernel (all-False mask -> contribute 0).
        return (jnp.minimum(c * steps + i, nblocks - 1), 0)

    kern = lambda x_ref, o_ref, acc_ref: _sparsity_kernel(
        x_ref, o_ref, acc_ref, n=n, steps=steps)

    partials = pl.pallas_call(
        kern,
        out_shape=jax.ShapeDtypeStruct((1, shards * _LANE), jnp.float32),
        grid_spec=pltpu.PrefetchScalarGridSpec(
            num_scalar_prefetch=0,
            grid=(shards, steps),
            in_specs=[pl.BlockSpec((_BLOCK_ROWS, _LANE), in_map)],
            out_specs=pl.BlockSpec((1, _LANE), lambda c, i: (0, c)),
            scratch_shapes=[pltpu.VMEM((_BLOCK_ROWS, _LANE), jnp.float32)],
        ),
        compiler_params=pltpu.CompilerParams(
            dimension_semantics=("parallel", "arbitrary")),
        cost_estimate=pl.CostEstimate(
            flops=3 * n,
            transcendentals=2 * n,                    # pow lowers to log + exp
            bytes_accessed=int(x2d.size * x2d.dtype.itemsize) + 4 * shards * _LANE),
    )(x2d)
    return jnp.sum(partials) / n


if __name__ == "__main__":
    key = jax.random.PRNGKey(0)
    k0, k1, k2 = jax.random.split(key, 3)

    cases = [
        jax.random.normal(k0, (2, 4, 16, 16), dtype=jnp.float32),    # small, lane-aligned
        jax.random.normal(k1, (128, 128, 3, 3), dtype=jnp.float32),  # multi-block, 2 shards, ragged tail
        jax.random.normal(k2, (64, 3, 3, 3), dtype=jnp.float32),     # n % 128 != 0 -> minimal-pad + mask path
        jax.random.normal(k0, (2, 4, 16, 16), dtype=jnp.bfloat16),   # bf16 feed, f32 accumulate
    ]
    for x in cases:
        loss = jax.block_until_ready(sparsity_loss(x))
        ref = jnp.mean(jnp.abs(x.astype(jnp.float32)) ** _POWER)
        assert jnp.allclose(loss, ref, rtol=1e-5, atol=1e-5), (x.shape, str(x.dtype), loss, ref)
    print("KERNEL_OK")
</pallas_src>

<mosaic_0001>
module attributes {stable_mosaic.version = 11 : i64} {
  func.func @_lambda_(%arg0: i32, %arg1: i32, %arg2: memref<512x128xf32, #tpu.memory_space<vmem>>, %arg3: memref<1x128xf32, #tpu.memory_space<vmem>>, %arg4: memref<512x128xf32, #tpu.memory_space<vmem>>) attributes {dimension_semantics = [#tpu.dimension_semantics<parallel>, #tpu.dimension_semantics<arbitrary>], iteration_bounds = array<i64: 1, 1>, scalar_prefetch = 0 : i64, scratch_operands = 1 : i64, tpu.core_type = #tpu.core_type<tc>, window_params = [{transform_indices = @transform_0, window_bounds = array<i64: 512, 128>}, {transform_indices = @transform_1, window_bounds = array<i64: 1, 128>}]} {
    %c0_i32 = arith.constant 0 : i32
    %0 = arith.cmpi eq, %arg1, %c0_i32 : i32
    %1 = arith.extui %0 : i1 to i32
    %c0_i32_0 = arith.constant 0 : i32
    %2 = arith.cmpi ne, %1, %c0_i32_0 : i32
    scf.if %2 {
      %cst_9 = arith.constant 0.000000e+00 : f32
      %27 = vector.broadcast %cst_9 : f32 to vector<512x128xf32>
      %c0_10 = arith.constant 0 : index
      %c0_11 = arith.constant 0 : index
      %28 = vector.load %arg4[%c0_10, %c0_11] : memref<512x128xf32, #tpu.memory_space<vmem>>, vector<512x128xf32>
      tpu.vector_store %arg4[%c0_10, %c0_11], %27 {strides = array<i32>} : memref<512x128xf32, #tpu.memory_space<vmem>>, vector<512x128xf32>,
    } else {
    }
    %c1_i32 = arith.constant 1 : i32
    %3 = arith.muli %arg0, %c1_i32 : i32
    %4 = arith.addi %3, %arg1 : i32
    %c65536_i32 = arith.constant 65536 : i32
    %5 = arith.muli %4, %c65536_i32 : i32
    %6 = tpu.iota {dimensions = array<i32: 0>} : vector<512x128xi32>
    %7 = tpu.iota {dimensions = array<i32: 1>} : vector<512x128xi32>
    %c128_i32 = arith.constant 128 : i32
    %8 = vector.broadcast %c128_i32 : i32 to vector<512x128xi32>
    %9 = arith.muli %6, %8 : vector<512x128xi32>
    %10 = vector.broadcast %5 : i32 to vector<512x128xi32>
    %11 = arith.addi %10, %9 : vector<512x128xi32>
    %12 = arith.addi %11, %7 : vector<512x128xi32>
    %c2048_i32 = arith.constant 2048 : i32
    %13 = vector.broadcast %c2048_i32 : i32 to vector<512x128xi32>
    %14 = arith.cmpi slt, %12, %13 : vector<512x128xi32>
    %c0 = arith.constant 0 : index
    %c0_1 = arith.constant 0 : index
    %15 = vector.load %arg2[%c0, %c0_1] : memref<512x128xf32, #tpu.memory_space<vmem>>, vector<512x128xf32>
    %cst = arith.constant 0.000000e+00 : f32
    %16 = vector.broadcast %cst : f32 to vector<512x128xf32>
    %17 = arith.select %14, %15, %16 : vector<512x128xi1>, vector<512x128xf32>
    %c0_2 = arith.constant 0 : index
    %c0_3 = arith.constant 0 : index
    %18 = vector.load %arg4[%c0_2, %c0_3] : memref<512x128xf32, #tpu.memory_space<vmem>>, vector<512x128xf32>
    %19 = math.absf %17 : vector<512x128xf32>
    %cst_4 = arith.constant 2.000000e-01 : f32
    %20 = vector.broadcast %cst_4 : f32 to vector<512x128xf32>
    %21 = math.powf %19, %20 : vector<512x128xf32>
    %22 = arith.addf %18, %21 : vector<512x128xf32>
    %c0_5 = arith.constant 0 : index
    %c0_6 = arith.constant 0 : index
    %23 = vector.load %arg4[%c0_5, %c0_6] : memref<512x128xf32, #tpu.memory_space<vmem>>, vector<512x128xf32>
    tpu.vector_store %arg4[%c0_5, %c0_6], %22 {strides = array<i32>} : memref<512x128xf32, #tpu.memory_space<vmem>>, vector<512x128xf32>,
    %c0_i32_7 = arith.constant 0 : i32
    %24 = arith.cmpi eq, %arg1, %c0_i32_7 : i32
    %25 = arith.extui %24 : i1 to i32
    %c0_i32_8 = arith.constant 0 : i32
    %26 = arith.cmpi ne, %25, %c0_i32_8 : i32
    scf.if %26 {
      %c0_9 = arith.constant 0 : index
      %c0_10 = arith.constant 0 : index
      %27 = vector.load %arg4[%c0_9, %c0_10] : memref<512x128xf32, #tpu.memory_space<vmem>>, vector<512x128xf32>
      %cst_11 = arith.constant dense<0.000000e+00> : vector<128xf32>
      %28 = vector.multi_reduction <add>, %27, %cst_11 [0] : vector<512x128xf32> to vector<128xf32>
      %29 = vector.shape_cast %28 : vector<128xf32> to vector<1x128xf32>
      %c0_12 = arith.constant 0 : index
      %c0_13 = arith.constant 0 : index
      %30 = vector.load %arg3[%c0_12, %c0_13] : memref<1x128xf32, #tpu.memory_space<vmem>>, vector<1x128xf32>
      tpu.vector_store %arg3[%c0_12, %c0_13], %29 {strides = array<i32>} : memref<1x128xf32, #tpu.memory_space<vmem>>, vector<1x128xf32>,
    } else {
    }
    return
  }
  func.func @transform_0(%arg0: i32, %arg1: i32) -> (i32, i32) {
    %c1_i32 = arith.constant 1 : i32
    %0 = arith.muli %arg0, %c1_i32 : i32
    %1 = arith.addi %0, %arg1 : i32
    %c0_i32 = arith.constant 0 : i32
    %2 = arith.minsi %1, %c0_i32 : i32
    %c0_i32_0 = arith.constant 0 : i32
    %c0_i32_1 = arith.constant 0 : i32
    return %2, %c0_i32_0 : i32, i32
  }
  func.func @transform_1(%arg0: i32, %arg1: i32) -> (i32, i32) {
    %c0_i32 = arith.constant 0 : i32
    %c0_i32_0 = arith.constant 0 : i32
    return %c0_i32, %arg0 : i32, i32
  }
}

</mosaic_0001>

<llo_original>
// kernel: tpu_custom_call.1
$region0: #{tpu_custom_call.1}
  #allocation0 [shape = 'u32[]', space=smem, size = 0x4, offset = 0x4, fixed_abs, tag = 'smem constant byte address 0x4 - core index']
  #allocation1 [shape = 'u32[144,128]{1,0:T(1,128)}', space=vmem, size = 0x12000, scoped, tag = 'internal scratch']
  #allocation2 [shape = 'f32[512,128]{1,0:T(8,128)}', space=vmem, size = 0x40000, scoped, tag = 'scratch operand']
  %s0 = inlined_call_operand.hbm [shape: f32[16,128], index: 0, kind: input, shape index: {}]
  %s1 = inlined_call_operand.hbm [shape: f32[1,128], index: 1, kind: output, shape index: {}]
  %s2 = sld [smem:[#allocation0]]
  $region26: #{tpu_custom_call.1} parent=0
    _
  %s4 = ssub.s32 1, %s2
  %s5 = scalar_select 0, %s4, %s2
  $region1: #{tpu_custom_call.1} parent=0
    #allocation3 [shape = 'u8[262144]{0}', space=vmem, size = 0x40000, scoped, tag = 'input window, operand 0, single buffered']
    #allocation4 [shape = 's32[1]{0}', space=sflag, size = 0x4, scoped, tag = 'scoped memory for tpu_custom_call.1']
    #allocation5 [shape = 's32[1]{0}', space=sflag, size = 0x4, scoped, tag = 'scoped memory for tpu_custom_call.1']
    #allocation6 [shape = 'u8[512]{0}', space=vmem, size = 0x400, scoped, tag = 'output window, operand 0, single buffered']
    %6 = vsyncpa [#allocation4], 0
    %7 = vsyncpa [#allocation5], 0
    // Predicated region
    $region2: #{tpu_custom_call.1} parent=1 // pred_check
      _
    $region3: #{tpu_custom_call.1} parent=1 // pred_check_branch
      %9 = sbr.rel (0) target = $region5
    $region4: #{tpu_custom_call.1} parent=1 // pred_region
      %s10 = sadd.s32 0, 0
      %p11 = scmp.lt.s32.totalorder %s10, 0
      %s12 = scalar_select %p11, %s10, 0
      %s13 = smul.u32 64, %s12
      %s14 = ssub.s32 2, %s13
      %s15 = smul.u32 128, %s14
      %s17 = ssub.s32 8192, %s15
      %18 = vsyncadd [#allocation4], %s17
      %p19 = scmp.ne.s32.totalorder 0, %s15
      %s20 = smul.addr %s13, 128
      %s21 = scalar_lea.hbm %s0, %s20
      %s22 = smul.u32 8, %s14
      %s23 = sshll.u32 [#allocation3], 4
      %s24 = int_to_ptr.vmem [resolvable:$true] %s23
      %s25 = sshll.u32 %s22, 4
      %29 = dma.hbm_to_vmem [thread:$0]  (%p19), %s21, %s25, %s24, [#allocation4], 128, 128, 8
    $region5: #{tpu_custom_call.1} parent=1 // pred_fallthru
      _
    // Predicated region
    $region6: #{tpu_custom_call.1} parent=1 // pred_check
      _
    $region7: #{tpu_custom_call.1} parent=1 // pred_check_branch
      %31 = sbr.rel (0) target = $region9
    $region8: #{tpu_custom_call.1} parent=1 // pred_region
      %32 = dma.done [#allocation4], 8192
    $region9: #{tpu_custom_call.1} parent=1 // pred_fallthru
      _
    %s33 = sadd.s32 0, 0
    %p34 = scmp.lt.s32.totalorder %s33, 0
    %s35 = scalar_select %p34, %s33, 0
    %s36 = smul.u32 64, %s35
    %s37 = ssub.s32 2, %s36
    %s38 = smul.u32 128, %s37
    %p39 = scmp.eq.s32.totalorder 0, 0
    // Predicated region
    $region10: #{tpu_custom_call.1} parent=1 // pred_check
      %p40 = pneg %p39
    $region11: #{tpu_custom_call.1} parent=1 // pred_check_branch
      %42 = sbr.rel (%p40) target = $region13
    $region12: #{tpu_custom_call.1} parent=1 // pred_region
      %43 = vst [vmem:[#allocation2] sm:$0xff] 0.0
      %44 = vst [vmem:[#allocation2 + $0x8] sm:$0xff] 0.0
      %45 = vst [vmem:[#allocation2 + $0x10] sm:$0xff] 0.0
      %46 = vst [vmem:[#allocation2 + $0x18] sm:$0xff] 0.0
      %47 = vst [vmem:[#allocation2 + $0x20] sm:$0xff] 0.0
      %48 = vst [vmem:[#allocation2 + $0x28] sm:$0xff] 0.0
      %49 = vst [vmem:[#allocation2 + $0x30] sm:$0xff] 0.0
      %50 = vst [vmem:[#allocation2 + $0x38] sm:$0xff] 0.0
      %51 = vst [vmem:[#allocation2 + $0x40] sm:$0xff] 0.0
      %52 = vst [vmem:[#allocation2 + $0x48] sm:$0xff] 0.0
      %53 = vst [vmem:[#allocation2 + $0x50] sm:$0xff] 0.0
      %54 = vst [vmem:[#allocation2 + $0x58] sm:$0xff] 0.0
      %55 = vst [vmem:[#allocation2 + $0x60] sm:$0xff] 0.0
      %56 = vst [vmem:[#allocation2 + $0x68] sm:$0xff] 0.0
      %57 = vst [vmem:[#allocation2 + $0x70] sm:$0xff] 0.0
      %58 = vst [vmem:[#allocation2 + $0x78] sm:$0xff] 0.0
      %59 = vst [vmem:[#allocation2 + $0x80] sm:$0xff] 0.0
      %60 = vst [vmem:[#allocation2 + $0x88] sm:$0xff] 0.0
      %61 = vst [vmem:[#allocation2 + $0x90] sm:$0xff] 0.0
      %62 = vst [vmem:[#allocation2 + $0x98] sm:$0xff] 0.0
      %63 = vst [vmem:[#allocation2 + $0xa0] sm:$0xff] 0.0
      %64 = vst [vmem:[#allocation2 + $0xa8] sm:$0xff] 0.0
      %65 = vst [vmem:[#allocation2 + $0xb0] sm:$0xff] 0.0
      %66 = vst [vmem:[#allocation2 + $0xb8] sm:$0xff] 0.0
      %67 = vst [vmem:[#allocation2 + $0xc0] sm:$0xff] 0.0
      %68 = vst [vmem:[#allocation2 + $0xc8] sm:$0xff] 0.0
      %69 = vst [vmem:[#allocation2 + $0xd0] sm:$0xff] 0.0
      %70 = vst [vmem:[#allocation2 + $0xd8] sm:$0xff] 0.0
      %71 = vst [vmem:[#allocation2 + $0xe0] sm:$0xff] 0.0
      %72 = vst [vmem:[#allocation2 + $0xe8] sm:$0xff] 0.0
      %73 = vst [vmem:[#allocation2 + $0xf0] sm:$0xff] 0.0
      %74 = vst [vmem:[#allocation2 + $0xf8] sm:$0xff] 0.0
      %75 = vst [vmem:[#allocation2 + $0x100] sm:$0xff] 0.0
      %76 = vst [vmem:[#allocation2 + $0x108] sm:$0xff] 0.0
      %77 = vst [vmem:[#allocation2 + $0x110] sm:$0xff] 0.0
      %78 = vst [vmem:[#allocation2 + $0x118] sm:$0xff] 0.0
      %79 = vst [vmem:[#allocation2 + $0x120] sm:$0xff] 0.0
      %80 = vst [vmem:[#allocation2 + $0x128] sm:$0xff] 0.0
      %81 = vst [vmem:[#allocation2 + $0x130] sm:$0xff] 0.0
      %82 = vst [vmem:[#allocation2 + $0x138] sm:$0xff] 0.0
      %83 = vst [vmem:[#allocation2 + $0x140] sm:$0xff] 0.0
      %84 = vst [vmem:[#allocation2 + $0x148] sm:$0xff] 0.0
      %85 = vst [vmem:[#allocation2 + $0x150] sm:$0xff] 0.0
      %86 = vst [vmem:[#allocation2 + $0x158] sm:$0xff] 0.0
      %87 = vst [vmem:[#allocation2 + $0x160] sm:$0xff] 0.0
      %88 = vst [vmem:[#allocation2 + $0x168] sm:$0xff] 0.0
      %89 = vst [vmem:[#allocation2 + $0x170] sm:$0xff] 0.0
      %90 = vst [vmem:[#allocation2 + $0x178] sm:$0xff] 0.0
      %91 = vst [vmem:[#allocation2 + $0x180] sm:$0xff] 0.0
      %92 = vst [vmem:[#allocation2 + $0x188] sm:$0xff] 0.0
      %93 = vst [vmem:[#allocation2 + $0x190] sm:$0xff] 0.0
      %94 = vst [vmem:[#allocation2 + $0x198] sm:$0xff] 0.0
      %95 = vst [vmem:[#allocation2 + $0x1a0] sm:$0xff] 0.0
      %96 = vst [vmem:[#allocation2 + $0x1a8] sm:$0xff] 0.0
      %97 = vst [vmem:[#allocation2 + $0x1b0] sm:$0xff] 0.0
      %98 = vst [vmem:[#allocation2 + $0x1b8] sm:$0xff] 0.0
      %99 = vst [vmem:[#allocation2 + $0x1c0] sm:$0xff] 0.0
      %100 = vst [vmem:[#allocation2 + $0x1c8] sm:$0xff] 0.0
      %101 = vst [vmem:[#allocation2 + $0x1d0] sm:$0xff] 0.0
      %102 = vst [vmem:[#allocation2 + $0x1d8] sm:$0xff] 0.0
      %103 = vst [vmem:[#allocation2 + $0x1e0] sm:$0xff] 0.0
      %104 = vst [vmem:[#allocation2 + $0x1e8] sm:$0xff] 0.0
      %105 = vst [vmem:[#allocation2 + $0x1f0] sm:$0xff] 0.0
      %106 = vst [vmem:[#allocation2 + $0x1f8] sm:$0xff] 0.0
    $region13: #{tpu_custom_call.1} parent=1 // pred_fallthru
      _
    %s107 = sadd.s32 0, 0
    %s108 = smul.u32 %s107, 65536
    %v109 = vlaneseq
    %v110 = vshrl.u32 %v109, 7
    %v111 = vadd.s32 %v110, 8
    %v112 = vadd.s32 %v110, 16
    %v113 = vadd.s32 %v110, 24
    %v114 = vadd.s32 %v110, 32
    %v115 = vadd.s32 %v110, 40
    %v116 = vadd.s32 %v110, 48
    %v117 = vadd.s32 %v110, 56
    %v118 = vadd.s32 %v110, 64
    %v119 = vadd.s32 %v110, 72
    %v120 = vadd.s32 %v110, 80
    %v121 = vadd.s32 %v110, 88
    %v122 = vadd.s32 %v110, 96
    %v123 = vadd.s32 %v110, 104
    %v124 = vadd.s32 %v110, 112
    %v125 = vadd.s32 %v110, 120
    %v126 = vadd.s32 %v110, 128
    %v127 = vadd.s32 %v110, 136
    %v128 = vadd.s32 %v110, 144
    %v129 = vadd.s32 %v110, 152
    %v130 = vadd.s32 %v110, 160
    %v131 = vadd.s32 %v110, 168
    %v132 = vadd.s32 %v110, 176
    %v133 = vadd.s32 %v110, 184
    %v134 = vadd.s32 %v110, 192
    %v135 = vadd.s32 %v110, 200
    %v136 = vadd.s32 %v110, 208
    %v137 = vadd.s32 %v110, 216
    %v138 = vadd.s32 %v110, 224
    %v139 = vadd.s32 %v110, 232
    %v140 = vadd.s32 %v110, 240
    %v141 = vadd.s32 %v110, 248
    %v142 = vadd.s32 %v110, 256
    %v143 = vadd.s32 %v110, 264
    %v144 = vadd.s32 %v110, 272
    %v145 = vadd.s32 %v110, 280
    %v146 = vadd.s32 %v110, 288
    %v147 = vadd.s32 %v110, 296
    %v148 = vadd.s32 %v110, 304
    %v149 = vadd.s32 %v110, 312
    %v150 = vadd.s32 %v110, 320
    %v151 = vadd.s32 %v110, 328
    %v152 = vadd.s32 %v110, 336
    %v153 = vadd.s32 %v110, 344
    %v154 = vadd.s32 %v110, 352
    %v155 = vadd.s32 %v110, 360
    %v156 = vadd.s32 %v110, 368
    %v157 = vadd.s32 %v110, 376
    %v158 = vadd.s32 %v110, 384
    %v159 = vadd.s32 %v110, 392
    %v160 = vadd.s32 %v110, 400
    %v161 = vadd.s32 %v110, 408
    %v162 = vadd.s32 %v110, 416
    %v163 = vadd.s32 %v110, 424
    %v164 = vadd.s32 %v110, 432
    %v165 = vadd.s32 %v110, 440
    %v166 = vadd.s32 %v110, 448
    %v167 = vadd.s32 %v110, 456
    %v168 = vadd.s32 %v110, 464
    %v169 = vadd.s32 %v110, 472
    %v170 = vadd.s32 %v110, 480
    %v171 = vadd.s32 %v110, 488
    %v172 = vadd.s32 %v110, 496
    %v173 = vadd.s32 %v110, 504
    %v174 = vlaneseq
    %v175 = vand.u32 %v174, 127
    %v176 = vmul.u32 %v110, 128
    %v177 = vmul.u32 %v111, 128
    %v178 = vmul.u32 %v112, 128
    %v179 = vmul.u32 %v113, 128
    %v180 = vmul.u32 %v114, 128
    %v181 = vmul.u32 %v115, 128
    %v182 = vmul.u32 %v116, 128
    %v183 = vmul.u32 %v117, 128
    %v184 = vmul.u32 %v118, 128
    %v185 = vmul.u32 %v119, 128
    %v186 = vmul.u32 %v120, 128
    %v187 = vmul.u32 %v121, 128
    %v188 = vmul.u32 %v122, 128
    %v189 = vmul.u32 %v123, 128
    %v190 = vmul.u32 %v124, 128
    %v191 = vmul.u32 %v125, 128
    %v192 = vmul.u32 %v126, 128
    %v193 = vmul.u32 %v127, 128
    %v194 = vmul.u32 %v128, 128
    %v195 = vmul.u32 %v129, 128
    %v196 = vmul.u32 %v130, 128
    %v197 = vmul.u32 %v131, 128
    %v198 = vmul.u32 %v132, 128
    %v199 = vmul.u32 %v133, 128
    %v200 = vmul.u32 %v134, 128
    %v201 = vmul.u32 %v135, 128
    %v202 = vmul.u32 %v136, 128
    %v203 = vmul.u32 %v137, 128
    %v204 = vmul.u32 %v138, 128
    %v205 = vmul.u32 %v139, 128
    %v206 = vmul.u32 %v140, 128
    %v207 = vmul.u32 %v141, 128
    %v208 = vmul.u32 %v142, 128
    %v209 = vmul.u32 %v143, 128
    %v210 = vmul.u32 %v144, 128
    %v211 = vmul.u32 %v145, 128
    %v212 = vmul.u32 %v146, 128
    %v213 = vmul.u32 %v147, 128
    %v214 = vmul.u32 %v148, 128
    %v215 = vmul.u32 %v149, 128
    %v216 = vmul.u32 %v150, 128
    %v217 = vmul.u32 %v151, 128
    %v218 = vmul.u32 %v152, 128
    %v219 = vmul.u32 %v153, 128
    %v220 = vmul.u32 %v154, 128
    %v221 = vmul.u32 %v155, 128
    %v222 = vmul.u32 %v156, 128
    %v223 = vmul.u32 %v157, 128
    %v224 = vmul.u32 %v158, 128
    %v225 = vmul.u32 %v159, 128
    %v226 = vmul.u32 %v160, 128
    %v227 = vmul.u32 %v161, 128
    %v228 = vmul.u32 %v162, 128
    %v229 = vmul.u32 %v163, 128
    %v230 = vmul.u32 %v164, 128
    %v231 = vmul.u32 %v165, 128
    %v232 = vmul.u32 %v166, 128
    %v233 = vmul.u32 %v167, 128
    %v234 = vmul.u32 %v168, 128
    %v235 = vmul.u32 %v169, 128
    %v236 = vmul.u32 %v170, 128
    %v237 = vmul.u32 %v171, 128
    %v238 = vmul.u32 %v172, 128
    %v239 = vmul.u32 %v173, 128
    %v240 = vstv %s108
    %v241 = vadd.s32 %v240, %v176
    %v242 = vadd.s32 %v240, %v177
    %v243 = vadd.s32 %v240, %v178
    %v244 = vadd.s32 %v240, %v179
    %v245 = vadd.s32 %v240, %v180
    %v246 = vadd.s32 %v240, %v181
    %v247 = vadd.s32 %v240, %v182
    %v248 = vadd.s32 %v240, %v183
    %v249 = vadd.s32 %v240, %v184
    %v250 = vadd.s32 %v240, %v185
    %v251 = vadd.s32 %v240, %v186
    %v252 = vadd.s32 %v240, %v187
    %v253 = vadd.s32 %v240, %v188
    %v254 = vadd.s32 %v240, %v189
    %v255 = vadd.s32 %v240, %v190
    %v256 = vadd.s32 %v240, %v191
    %v257 = vadd.s32 %v240, %v192
    %v258 = vadd.s32 %v240, %v193
    %v259 = vadd.s32 %v240, %v194
    %v260 = vadd.s32 %v240, %v195
    %v261 = vadd.s32 %v240, %v196
    %v262 = vadd.s32 %v240, %v197
    %v263 = vadd.s32 %v240, %v198
    %v264 = vadd.s32 %v240, %v199
    %v265 = vadd.s32 %v240, %v200
    %v266 = vadd.s32 %v240, %v201
    %v267 = vadd.s32 %v240, %v202
    %v268 = vadd.s32 %v240, %v203
    %v269 = vadd.s32 %v240, %v204
    %v270 = vadd.s32 %v240, %v205
    %v271 = vadd.s32 %v240, %v206
    %v272 = vadd.s32 %v240, %v207
    %v273 = vadd.s32 %v240, %v208
    %v274 = vadd.s32 %v240, %v209
    %v275 = vadd.s32 %v240, %v210
    %v276 = vadd.s32 %v240, %v211
    %v277 = vadd.s32 %v240, %v212
    %v278 = vadd.s32 %v240, %v213
    %v279 = vadd.s32 %v240, %v214
    %v280 = vadd.s32 %v240, %v215
    %v281 = vadd.s32 %v240, %v216
    %v282 = vadd.s32 %v240, %v217
    %v283 = vadd.s32 %v240, %v218
    %v284 = vadd.s32 %v240, %v219
    %v285 = vadd.s32 %v240, %v220
    %v286 = vadd.s32 %v240, %v221
    %v287 = vadd.s32 %v240, %v222
    %v288 = vadd.s32 %v240, %v223
    %v289 = vadd.s32 %v240, %v224
    %v290 = vadd.s32 %v240, %v225
    %v291 = vadd.s32 %v240, %v226
    %v292 = vadd.s32 %v240, %v227
    %v293 = vadd.s32 %v240, %v228
    %v294 = vadd.s32 %v240, %v229
    %v295 = vadd.s32 %v240, %v230
    %v296 = vadd.s32 %v240, %v231
    %v297 = vadd.s32 %v240, %v232
    %v298 = vadd.s32 %v240, %v233
    %v299 = vadd.s32 %v240, %v234
    %v300 = vadd.s32 %v240, %v235
    %v301 = vadd.s32 %v240, %v236
    %v302 = vadd.s32 %v240, %v237
    %v303 = vadd.s32 %v240, %v238
    %v304 = vadd.s32 %v240, %v239
    %v305 = vadd.s32 %v241, %v175
    %v306 = vadd.s32 %v242, %v175
    %v307 = vadd.s32 %v243, %v175
    %v308 = vadd.s32 %v244, %v175
    %v309 = vadd.s32 %v245, %v175
    %v310 = vadd.s32 %v246, %v175
    %v311 = vadd.s32 %v247, %v175
    %v312 = vadd.s32 %v248, %v175
    %v313 = vadd.s32 %v249, %v175
    %v314 = vadd.s32 %v250, %v175
    %v315 = vadd.s32 %v251, %v175
    %v316 = vadd.s32 %v252, %v175
    %v317 = vadd.s32 %v253, %v175
    %v318 = vadd.s32 %v254, %v175
    %v319 = vadd.s32 %v255, %v175
    %v320 = vadd.s32 %v256, %v175
    %v321 = vadd.s32 %v257, %v175
    %v322 = vadd.s32 %v258, %v175
    %v323 = vadd.s32 %v259, %v175
    %v324 = vadd.s32 %v260, %v175
    %v325 = vadd.s32 %v261, %v175
    %v326 = vadd.s32 %v262, %v175
    %v327 = vadd.s32 %v263, %v175
    %v328 = vadd.s32 %v264, %v175
    %v329 = vadd.s32 %v265, %v175
    %v330 = vadd.s32 %v266, %v175
    %v331 = vadd.s32 %v267, %v175
    %v332 = vadd.s32 %v268, %v175
    %v333 = vadd.s32 %v269, %v175
    %v334 = vadd.s32 %v270, %v175
    %v335 = vadd.s32 %v271, %v175
    %v336 = vadd.s32 %v272, %v175
    %v337 = vadd.s32 %v273, %v175
    %v338 = vadd.s32 %v274, %v175
    %v339 = vadd.s32 %v275, %v175
    %v340 = vadd.s32 %v276, %v175
    %v341 = vadd.s32 %v277, %v175
    %v342 = vadd.s32 %v278, %v175
    %v343 = vadd.s32 %v279, %v175
    %v344 = vadd.s32 %v280, %v175
    %v345 = vadd.s32 %v281, %v175
    %v346 = vadd.s32 %v282, %v175
    %v347 = vadd.s32 %v283, %v175
    %v348 = vadd.s32 %v284, %v175
    %v349 = vadd.s32 %v285, %v175
    %v350 = vadd.s32 %v286, %v175
    %v351 = vadd.s32 %v287, %v175
    %v352 = vadd.s32 %v288, %v175
    %v353 = vadd.s32 %v289, %v175
    %v354 = vadd.s32 %v290, %v175
    %v355 = vadd.s32 %v291, %v175
    %v356 = vadd.s32 %v292, %v175
    %v357 = vadd.s32 %v293, %v175
    %v358 = vadd.s32 %v294, %v175
    %v359 = vadd.s32 %v295, %v175
    %v360 = vadd.s32 %v296, %v175
    %v361 = vadd.s32 %v297, %v175
    %v362 = vadd.s32 %v298, %v175
    %v363 = vadd.s32 %v299, %v175
    %v364 = vadd.s32 %v300, %v175
    %v365 = vadd.s32 %v301, %v175
    %v366 = vadd.s32 %v302, %v175
    %v367 = vadd.s32 %v303, %v175
    %v368 = vadd.s32 %v304, %v175
    %vm369 = vcmp.lt.s32.totalorder %v305, 2048
    %vm370 = vcmp.lt.s32.totalorder %v306, 2048
    %vm371 = vcmp.lt.s32.totalorder %v307, 2048
    %vm372 = vcmp.lt.s32.totalorder %v308, 2048
    %vm373 = vcmp.lt.s32.totalorder %v309, 2048
    %vm374 = vcmp.lt.s32.totalorder %v310, 2048
    %vm375 = vcmp.lt.s32.totalorder %v311, 2048
    %vm376 = vcmp.lt.s32.totalorder %v312, 2048
    %vm377 = vcmp.lt.s32.totalorder %v313, 2048
    %vm378 = vcmp.lt.s32.totalorder %v314, 2048
    %vm379 = vcmp.lt.s32.totalorder %v315, 2048
    %vm380 = vcmp.lt.s32.totalorder %v316, 2048
    %vm381 = vcmp.lt.s32.totalorder %v317, 2048
    %vm382 = vcmp.lt.s32.totalorder %v318, 2048
    %vm383 = vcmp.lt.s32.totalorder %v319, 2048
    %vm384 = vcmp.lt.s32.totalorder %v320, 2048
    %vm385 = vcmp.lt.s32.totalorder %v321, 2048
    %vm386 = vcmp.lt.s32.totalorder %v322, 2048
    %vm387 = vcmp.lt.s32.totalorder %v323, 2048
    %vm388 = vcmp.lt.s32.totalorder %v324, 2048
    %vm389 = vcmp.lt.s32.totalorder %v325, 2048
    %vm390 = vcmp.lt.s32.totalorder %v326, 2048
    %vm391 = vcmp.lt.s32.totalorder %v327, 2048
    %vm392 = vcmp.lt.s32.totalorder %v328, 2048
    %vm393 = vcmp.lt.s32.totalorder %v329, 2048
    %vm394 = vcmp.lt.s32.totalorder %v330, 2048
    %vm395 = vcmp.lt.s32.totalorder %v331, 2048
    %vm396 = vcmp.lt.s32.totalorder %v332, 2048
    %vm397 = vcmp.lt.s32.totalorder %v333, 2048
    %vm398 = vcmp.lt.s32.totalorder %v334, 2048
    %vm399 = vcmp.lt.s32.totalorder %v335, 2048
    %vm400 = vcmp.lt.s32.totalorder %v336, 2048
    %vm401 = vcmp.lt.s32.totalorder %v337, 2048
    %vm402 = vcmp.lt.s32.totalorder %v338, 2048
    %vm403 = vcmp.lt.s32.totalorder %v339, 2048
    %vm404 = vcmp.lt.s32.totalorder %v340, 2048
    %vm405 = vcmp.lt.s32.totalorder %v341, 2048
    %vm406 = vcmp.lt.s32.totalorder %v342, 2048
    %vm407 = vcmp.lt.s32.totalorder %v343, 2048
    %vm408 = vcmp.lt.s32.totalorder %v344, 2048
    %vm409 = vcmp.lt.s32.totalorder %v345, 2048
    %vm410 = vcmp.lt.s32.totalorder %v346, 2048
    %vm411 = vcmp.lt.s32.totalorder %v347, 2048
    %vm412 = vcmp.lt.s32.totalorder %v348, 2048
    %vm413 = vcmp.lt.s32.totalorder %v349, 2048
    %vm414 = vcmp.lt.s32.totalorder %v350, 2048
    %vm415 = vcmp.lt.s32.totalorder %v351, 2048
    %vm416 = vcmp.lt.s32.totalorder %v352, 2048
    %vm417 = vcmp.lt.s32.totalorder %v353, 2048
    %vm418 = vcmp.lt.s32.totalorder %v354, 2048
    %vm419 = vcmp.lt.s32.totalorder %v355, 2048
    %vm420 = vcmp.lt.s32.totalorder %v356, 2048
    %vm421 = vcmp.lt.s32.totalorder %v357, 2048
    %vm422 = vcmp.lt.s32.totalorder %v358, 2048
    %vm423 = vcmp.lt.s32.totalorder %v359, 2048
    %vm424 = vcmp.lt.s32.totalorder %v360, 2048
    %vm425 = vcmp.lt.s32.totalorder %v361, 2048
    %vm426 = vcmp.lt.s32.totalorder %v362, 2048
    %vm427 = vcmp.lt.s32.totalorder %v363, 2048
    %vm428 = vcmp.lt.s32.totalorder %v364, 2048
    %vm429 = vcmp.lt.s32.totalorder %v365, 2048
    %vm430 = vcmp.lt.s32.totalorder %v366, 2048
    %vm431 = vcmp.lt.s32.totalorder %v367, 2048
    %vm432 = vcmp.lt.s32.totalorder %v368, 2048
    %v433 = vld [vmem:[#allocation3] sm:$0xff]
    %v434 = vld [vmem:[#allocation3 + $0x8] sm:$0xff]
    %v435 = vld [vmem:[#allocation3 + $0x10] sm:$0xff]
    %v436 = vld [vmem:[#allocation3 + $0x18] sm:$0xff]
    %v437 = vld [vmem:[#allocation3 + $0x20] sm:$0xff]
    %v438 = vld [vmem:[#allocation3 + $0x28] sm:$0xff]
    %v439 = vld [vmem:[#allocation3 + $0x30] sm:$0xff]
    %v440 = vld [vmem:[#allocation3 + $0x38] sm:$0xff]
    %v441 = vld [vmem:[#allocation3 + $0x40] sm:$0xff]
    %v442 = vld [vmem:[#allocation3 + $0x48] sm:$0xff]
    %v443 = vld [vmem:[#allocation3 + $0x50] sm:$0xff]
    %v444 = vld [vmem:[#allocation3 + $0x58] sm:$0xff]
    %v445 = vld [vmem:[#allocation3 + $0x60] sm:$0xff]
    %v446 = vld [vmem:[#allocation3 + $0x68] sm:$0xff]
    %v447 = vld [vmem:[#allocation3 + $0x70] sm:$0xff]
    %v448 = vld [vmem:[#allocation3 + $0x78] sm:$0xff]
    %v449 = vld [vmem:[#allocation3 + $0x80] sm:$0xff]
    %v450 = vld [vmem:[#allocation3 + $0x88] sm:$0xff]
    %v451 = vld [vmem:[#allocation3 + $0x90] sm:$0xff]
    %v452 = vld [vmem:[#allocation3 + $0x98] sm:$0xff]
    %v453 = vld [vmem:[#allocation3 + $0xa0] sm:$0xff]
    %v454 = vld [vmem:[#allocation3 + $0xa8] sm:$0xff]
    %v455 = vld [vmem:[#allocation3 + $0xb0] sm:$0xff]
    %v456 = vld [vmem:[#allocation3 + $0xb8] sm:$0xff]
    %v457 = vld [vmem:[#allocation3 + $0xc0] sm:$0xff]
    %v458 = vld [vmem:[#allocation3 + $0xc8] sm:$0xff]
    %v459 = vld [vmem:[#allocation3 + $0xd0] sm:$0xff]
    %v460 = vld [vmem:[#allocation3 + $0xd8] sm:$0xff]
    %v461 = vld [vmem:[#allocation3 + $0xe0] sm:$0xff]
    %v462 = vld [vmem:[#allocation3 + $0xe8] sm:$0xff]
    %v463 = vld [vmem:[#allocation3 + $0xf0] sm:$0xff]
    %v464 = vld [vmem:[#allocation3 + $0xf8] sm:$0xff]
    %v465 = vld [vmem:[#allocation3 + $0x100] sm:$0xff]
    %v466 = vld [vmem:[#allocation3 + $0x108] sm:$0xff]
    %v467 = vld [vmem:[#allocation3 + $0x110] sm:$0xff]
    %v468 = vld [vmem:[#allocation3 + $0x118] sm:$0xff]
    %v469 = vld [vmem:[#allocation3 + $0x120] sm:$0xff]
    %v470 = vld [vmem:[#allocation3 + $0x128] sm:$0xff]
    %v471 = vld [vmem:[#allocation3 + $0x130] sm:$0xff]
    %v472 = vld [vmem:[#allocation3 + $0x138] sm:$0xff]
    %v473 = vld [vmem:[#allocation3 + $0x140] sm:$0xff]
    %v474 = vld [vmem:[#allocation3 + $0x148] sm:$0xff]
    %v475 = vld [vmem:[#allocation3 + $0x150] sm:$0xff]
    %v476 = vld [vmem:[#allocation3 + $0x158] sm:$0xff]
    %v477 = vld [vmem:[#allocation3 + $0x160] sm:$0xff]
    %v478 = vld [vmem:[#allocation3 + $0x168] sm:$0xff]
    %v479 = vld [vmem:[#allocation3 + $0x170] sm:$0xff]
    %v480 = vld [vmem:[#allocation3 + $0x178] sm:$0xff]
    %v481 = vld [vmem:[#allocation3 + $0x180] sm:$0xff]
    %v482 = vld [vmem:[#allocation3 + $0x188] sm:$0xff]
    %v483 = vld [vmem:[#allocation3 + $0x190] sm:$0xff]
    %v484 = vld [vmem:[#allocation3 + $0x198] sm:$0xff]
    %v485 = vld [vmem:[#allocation3 + $0x1a0] sm:$0xff]
    %v486 = vld [vmem:[#allocation3 + $0x1a8] sm:$0xff]
    %v487 = vld [vmem:[#allocation3 + $0x1b0] sm:$0xff]
    %v488 = vld [vmem:[#allocation3 + $0x1b8] sm:$0xff]
    %v489 = vld [vmem:[#allocation3 + $0x1c0] sm:$0xff]
    %v490 = vld [vmem:[#allocation3 + $0x1c8] sm:$0xff]
    %v491 = vld [vmem:[#allocation3 + $0x1d0] sm:$0xff]
    %v492 = vld [vmem:[#allocation3 + $0x1d8] sm:$0xff]
    %v493 = vld [vmem:[#allocation3 + $0x1e0] sm:$0xff]
    %v494 = vld [vmem:[#allocation3 + $0x1e8] sm:$0xff]
    %v495 = vld [vmem:[#allocation3 + $0x1f0] sm:$0xff]
    %v496 = vld [vmem:[#allocation3 + $0x1f8] sm:$0xff]
    %v497 = vsel %vm369, %v433, 0.0
    %v498 = vsel %vm370, %v434, 0.0
    %v499 = vsel %vm371, %v435, 0.0
    %v500 = vsel %vm372, %v436, 0.0
    %v501 = vsel %vm373, %v437, 0.0
    %v502 = vsel %vm374, %v438, 0.0
    %v503 = vsel %vm375, %v439, 0.0
    %v504 = vsel %vm376, %v440, 0.0
    %v505 = vsel %vm377, %v441, 0.0
    %v506 = vsel %vm378, %v442, 0.0
    %v507 = vsel %vm379, %v443, 0.0
    %v508 = vsel %vm380, %v444, 0.0
    %v509 = vsel %vm381, %v445, 0.0
    %v510 = vsel %vm382, %v446, 0.0
    %v511 = vsel %vm383, %v447, 0.0
    %v512 = vsel %vm384, %v448, 0.0
    %v513 = vsel %vm385, %v449, 0.0
    %v514 = vsel %vm386, %v450, 0.0
    %v515 = vsel %vm387, %v451, 0.0
    %v516 = vsel %vm388, %v452, 0.0
    %v517 = vsel %vm389, %v453, 0.0
    %v518 = vsel %vm390, %v454, 0.0
    %v519 = vsel %vm391, %v455, 0.0
    %v520 = vsel %vm392, %v456, 0.0
    %v521 = vsel %vm393, %v457, 0.0
    %v522 = vsel %vm394, %v458, 0.0
    %v523 = vsel %vm395, %v459, 0.0
    %v524 = vsel %vm396, %v460, 0.0
    %v525 = vsel %vm397, %v461, 0.0
    %v526 = vsel %vm398, %v462, 0.0
    %v527 = vsel %vm399, %v463, 0.0
    %v528 = vsel %vm400, %v464, 0.0
    %v529 = vsel %vm401, %v465, 0.0
    %v530 = vsel %vm402, %v466, 0.0
    %v531 = vsel %vm403, %v467, 0.0
    %v532 = vsel %vm404, %v468, 0.0
    %v533 = vsel %vm405, %v469, 0.0
    %v534 = vsel %vm406, %v470, 0.0
    %v535 = vsel %vm407, %v471, 0.0
    %v536 = vsel %vm408, %v472, 0.0
    %v537 = vsel %vm409, %v473, 0.0
    %v538 = vsel %vm410, %v474, 0.0
    %v539 = vsel %vm411, %v475, 0.0
    %v540 = vsel %vm412, %v476, 0.0
    %v541 = vsel %vm413, %v477, 0.0
    %v542 = vsel %vm414, %v478, 0.0
    %v543 = vsel %vm415, %v479, 0.0
    %v544 = vsel %vm416, %v480, 0.0
    %v545 = vsel %vm417, %v481, 0.0
    %v546 = vsel %vm418, %v482, 0.0
    %v547 = vsel %vm419, %v483, 0.0
    %v548 = vsel %vm420, %v484, 0.0
    %v549 = vsel %vm421, %v485, 0.0
    %v550 = vsel %vm422, %v486, 0.0
    %v551 = vsel %vm423, %v487, 0.0
    %v552 = vsel %vm424, %v488, 0.0
    %v553 = vsel %vm425, %v489, 0.0
    %v554 = vsel %vm426, %v490, 0.0
    %v555 = vsel %vm427, %v491, 0.0
    %v556 = vsel %vm428, %v492, 0.0
    %v557 = vsel %vm429, %v493, 0.0
    %v558 = vsel %vm430, %v494, 0.0
    %v559 = vsel %vm431, %v495, 0.0
    %v560 = vsel %vm432, %v496, 0.0
    %v561 = vld [vmem:[#allocation2] sm:$0xff]
    %v562 = vld [vmem:[#allocation2 + $0x8] sm:$0xff]
    %v563 = vld [vmem:[#allocation2 + $0x10] sm:$0xff]
    %v564 = vld [vmem:[#allocation2 + $0x18] sm:$0xff]
    %v565 = vld [vmem:[#allocation2 + $0x20] sm:$0xff]
    %v566 = vld [vmem:[#allocation2 + $0x28] sm:$0xff]
    %v567 = vld [vmem:[#allocation2 + $0x30] sm:$0xff]
    %v568 = vld [vmem:[#allocation2 + $0x38] sm:$0xff]
    %v569 = vld [vmem:[#allocation2 + $0x40] sm:$0xff]
    %v570 = vld [vmem:[#allocation2 + $0x48] sm:$0xff]
    %v571 = vld [vmem:[#allocation2 + $0x50] sm:$0xff]
    %v572 = vld [vmem:[#allocation2 + $0x58] sm:$0xff]
    %v573 = vld [vmem:[#allocation2 + $0x60] sm:$0xff]
    %v574 = vld [vmem:[#allocation2 + $0x68] sm:$0xff]
    %v575 = vld [vmem:[#allocation2 + $0x70] sm:$0xff]
    %v576 = vld [vmem:[#allocation2 + $0x78] sm:$0xff]
    %v577 = vld [vmem:[#allocation2 + $0x80] sm:$0xff]
    %v578 = vld [vmem:[#allocation2 + $0x88] sm:$0xff]
    %v579 = vld [vmem:[#allocation2 + $0x90] sm:$0xff]
    %v580 = vld [vmem:[#allocation2 + $0x98] sm:$0xff]
    %v581 = vld [vmem:[#allocation2 + $0xa0] sm:$0xff]
    %v582 = vld [vmem:[#allocation2 + $0xa8] sm:$0xff]
    %v583 = vld [vmem:[#allocation2 + $0xb0] sm:$0xff]
    %v584 = vld [vmem:[#allocation2 + $0xb8] sm:$0xff]
    %v585 = vld [vmem:[#allocation2 + $0xc0] sm:$0xff]
    %v586 = vld [vmem:[#allocation2 + $0xc8] sm:$0xff]
    %v587 = vld [vmem:[#allocation2 + $0xd0] sm:$0xff]
    %v588 = vld [vmem:[#allocation2 + $0xd8] sm:$0xff]
    %v589 = vld [vmem:[#allocation2 + $0xe0] sm:$0xff]
    %v590 = vld [vmem:[#allocation2 + $0xe8] sm:$0xff]
    %v591 = vld [vmem:[#allocation2 + $0xf0] sm:$0xff]
    %v592 = vld [vmem:[#allocation2 + $0xf8] sm:$0xff]
    %v593 = vld [vmem:[#allocation2 + $0x100] sm:$0xff]
    %v594 = vld [vmem:[#allocation2 + $0x108] sm:$0xff]
    %v595 = vld [vmem:[#allocation2 + $0x110] sm:$0xff]
    %v596 = vld [vmem:[#allocation2 + $0x118] sm:$0xff]
    %v597 = vld [vmem:[#allocation2 + $0x120] sm:$0xff]
    %v598 = vld [vmem:[#allocation2 + $0x128] sm:$0xff]
    %v599 = vld [vmem:[#allocation2 + $0x130] sm:$0xff]
    %v600 = vld [vmem:[#allocation2 + $0x138] sm:$0xff]
    %v601 = vld [vmem:[#allocation2 + $0x140] sm:$0xff]
    %v602 = vld [vmem:[#allocation2 + $0x148] sm:$0xff]
    %v603 = vld [vmem:[#allocation2 + $0x150] sm:$0xff]
    %v604 = vld [vmem:[#allocation2 + $0x158] sm:$0xff]
    %v605 = vld [vmem:[#allocation2 + $0x160] sm:$0xff]
    %v606 = vld [vmem:[#allocation2 + $0x168] sm:$0xff]
    %v607 = vld [vmem:[#allocation2 + $0x170] sm:$0xff]
    %v608 = vld [vmem:[#allocation2 + $0x178] sm:$0xff]
    %v609 = vld [vmem:[#allocation2 + $0x180] sm:$0xff]
    %v610 = vld [vmem:[#allocation2 + $0x188] sm:$0xff]
    %v611 = vld [vmem:[#allocation2 + $0x190] sm:$0xff]
    %v612 = vld [vmem:[#allocation2 + $0x198] sm:$0xff]
    %v613 = vld [vmem:[#allocation2 + $0x1a0] sm:$0xff]
    %v614 = vld [vmem:[#allocation2 + $0x1a8] sm:$0xff]
    %v615 = vld [vmem:[#allocation2 + $0x1b0] sm:$0xff]
    %v616 = vld [vmem:[#allocation2 + $0x1b8] sm:$0xff]
    %v617 = vld [vmem:[#allocation2 + $0x1c0] sm:$0xff]
    %v618 = vld [vmem:[#allocation2 + $0x1c8] sm:$0xff]
    %v619 = vld [vmem:[#allocation2 + $0x1d0] sm:$0xff]
    %v620 = vld [vmem:[#allocation2 + $0x1d8] sm:$0xff]
    %v621 = vld [vmem:[#allocation2 + $0x1e0] sm:$0xff]
    %v622 = vld [vmem:[#allocation2 + $0x1e8] sm:$0xff]
    %v623 = vld [vmem:[#allocation2 + $0x1f0] sm:$0xff]
    %v624 = vld [vmem:[#allocation2 + $0x1f8] sm:$0xff]
    %v625 = vand.u32 2147483647, %v497
    %v626 = vand.u32 2147483647, %v498
    %v627 = vand.u32 2147483647, %v499
    %v628 = vand.u32 2147483647, %v500
    %v629 = vand.u32 2147483647, %v501
    %v630 = vand.u32 2147483647, %v502
    %v631 = vand.u32 2147483647, %v503
    %v632 = vand.u32 2147483647, %v504
    %v633 = vand.u32 2147483647, %v505
    %v634 = vand.u32 2147483647, %v506
    %v635 = vand.u32 2147483647, %v507
    %v636 = vand.u32 2147483647, %v508
    %v637 = vand.u32 2147483647, %v509
    %v638 = vand.u32 2147483647, %v510
    %v639 = vand.u32 2147483647, %v511
    %v640 = vand.u32 2147483647, %v512
    %v641 = vand.u32 2147483647, %v513
    %v642 = vand.u32 2147483647, %v514
    %v643 = vand.u32 2147483647, %v515
    %v644 = vand.u32 2147483647, %v516
    %v645 = vand.u32 2147483647, %v517
    %v646 = vand.u32 2147483647, %v518
    %v647 = vand.u32 2147483647, %v519
    %v648 = vand.u32 2147483647, %v520
    %v649 = vand.u32 2147483647, %v521
    %v650 = vand.u32 2147483647, %v522
    %v651 = vand.u32 2147483647, %v523
    %v652 = vand.u32 2147483647, %v524
    %v653 = vand.u32 2147483647, %v525
    %v654 = vand.u32 2147483647, %v526
    %v655 = vand.u32 2147483647, %v527
    %v656 = vand.u32 2147483647, %v528
    %v657 = vand.u32 2147483647, %v529
    %v658 = vand.u32 2147483647, %v530
    %v659 = vand.u32 2147483647, %v531
    %v660 = vand.u32 2147483647, %v532
    %v661 = vand.u32 2147483647, %v533
    %v662 = vand.u32 2147483647, %v534
    %v663 = vand.u32 2147483647, %v535
    %v664 = vand.u32 2147483647, %v536
    %v665 = vand.u32 2147483647, %v537
    %v666 = vand.u32 2147483647, %v538
    %v667 = vand.u32 2147483647, %v539
    %v668 = vand.u32 2147483647, %v540
    %v669 = vand.u32 2147483647, %v541
    %v670 = vand.u32 2147483647, %v542
    %v671 = vand.u32 2147483647, %v543
    %v672 = vand.u32 2147483647, %v544
    %v673 = vand.u32 2147483647, %v545
    %v674 = vand.u32 2147483647, %v546
    %v675 = vand.u32 2147483647, %v547
    %v676 = vand.u32 2147483647, %v548
    %v677 = vand.u32 2147483647, %v549
    %v678 = vand.u32 2147483647, %v550
    %v679 = vand.u32 2147483647, %v551
    %v680 = vand.u32 2147483647, %v552
    %v681 = vand.u32 2147483647, %v553
    %v682 = vand.u32 2147483647, %v554
    %v683 = vand.u32 2147483647, %v555
    %v684 = vand.u32 2147483647, %v556
    %v685 = vand.u32 2147483647, %v557
    %v686 = vand.u32 2147483647, %v558
    %v687 = vand.u32 2147483647, %v559
    %v688 = vand.u32 2147483647, %v560
    %v689 = vpow.f32 %v625, 0.2
    %v690 = vpow.f32 %v626, 0.2
    %v691 = vpow.f32 %v627, 0.2
    %v692 = vpow.f32 %v628, 0.2
    %v693 = vpow.f32 %v629, 0.2
    %v694 = vpow.f32 %v630, 0.2
    %v695 = vpow.f32 %v631, 0.2
    %v696 = vpow.f32 %v632, 0.2
    %v697 = vpow.f32 %v633, 0.2
    %v698 = vpow.f32 %v634, 0.2
    %v699 = vpow.f32 %v635, 0.2
    %v700 = vpow.f32 %v636, 0.2
    %v701 = vpow.f32 %v637, 0.2
    %v702 = vpow.f32 %v638, 0.2
    %v703 = vpow.f32 %v639, 0.2
    %v704 = vpow.f32 %v640, 0.2
    %v705 = vpow.f32 %v641, 0.2
    %v706 = vpow.f32 %v642, 0.2
    %v707 = vpow.f32 %v643, 0.2
    %v708 = vpow.f32 %v644, 0.2
    %v709 = vpow.f32 %v645, 0.2
    %v710 = vpow.f32 %v646, 0.2
    %v711 = vpow.f32 %v647, 0.2
    %v712 = vpow.f32 %v648, 0.2
    %v713 = vpow.f32 %v649, 0.2
    %v714 = vpow.f32 %v650, 0.2
    %v715 = vpow.f32 %v651, 0.2
    %v716 = vpow.f32 %v652, 0.2
    %v717 = vpow.f32 %v653, 0.2
    %v718 = vpow.f32 %v654, 0.2
    %v719 = vpow.f32 %v655, 0.2
    %v720 = vpow.f32 %v656, 0.2
    %v721 = vpow.f32 %v657, 0.2
    %v722 = vpow.f32 %v658, 0.2
    %v723 = vpow.f32 %v659, 0.2
    %v724 = vpow.f32 %v660, 0.2
    %v725 = vpow.f32 %v661, 0.2
    %v726 = vpow.f32 %v662, 0.2
    %v727 = vpow.f32 %v663, 0.2
    %v728 = vpow.f32 %v664, 0.2
    %v729 = vpow.f32 %v665, 0.2
    %v730 = vpow.f32 %v666, 0.2
    %v731 = vpow.f32 %v667, 0.2
    %v732 = vpow.f32 %v668, 0.2
    %v733 = vpow.f32 %v669, 0.2
    %v734 = vpow.f32 %v670, 0.2
    %v735 = vpow.f32 %v671, 0.2
    %v736 = vpow.f32 %v672, 0.2
    %v737 = vpow.f32 %v673, 0.2
    %v738 = vpow.f32 %v674, 0.2
    %v739 = vpow.f32 %v675, 0.2
    %v740 = vpow.f32 %v676, 0.2
    %v741 = vpow.f32 %v677, 0.2
    %v742 = vpow.f32 %v678, 0.2
    %v743 = vpow.f32 %v679, 0.2
    %v744 = vpow.f32 %v680, 0.2
    %v745 = vpow.f32 %v681, 0.2
    %v746 = vpow.f32 %v682, 0.2
    %v747 = vpow.f32 %v683, 0.2
    %v748 = vpow.f32 %v684, 0.2
    %v749 = vpow.f32 %v685, 0.2
    %v750 = vpow.f32 %v686, 0.2
    %v751 = vpow.f32 %v687, 0.2
    %v752 = vpow.f32 %v688, 0.2
    %v753 = vadd.f32 %v561, %v689
    %v754 = vadd.f32 %v562, %v690
    %v755 = vadd.f32 %v563, %v691
    %v756 = vadd.f32 %v564, %v692
    %v757 = vadd.f32 %v565, %v693
    %v758 = vadd.f32 %v566, %v694
    %v759 = vadd.f32 %v567, %v695
    %v760 = vadd.f32 %v568, %v696
    %v761 = vadd.f32 %v569, %v697
    %v762 = vadd.f32 %v570, %v698
    %v763 = vadd.f32 %v571, %v699
    %v764 = vadd.f32 %v572, %v700
    %v765 = vadd.f32 %v573, %v701
    %v766 = vadd.f32 %v574, %v702
    %v767 = vadd.f32 %v575, %v703
    %v768 = vadd.f32 %v576, %v704
    %v769 = vadd.f32 %v577, %v705
    %v770 = vadd.f32 %v578, %v706
    %v771 = vadd.f32 %v579, %v707
    %v772 = vadd.f32 %v580, %v708
    %v773 = vadd.f32 %v581, %v709
    %v774 = vadd.f32 %v582, %v710
    %v775 = vadd.f32 %v583, %v711
    %v776 = vadd.f32 %v584, %v712
    %v777 = vadd.f32 %v585, %v713
    %v778 = vadd.f32 %v586, %v714
    %v779 = vadd.f32 %v587, %v715
    %v780 = vadd.f32 %v588, %v716
    %v781 = vadd.f32 %v589, %v717
    %v782 = vadd.f32 %v590, %v718
    %v783 = vadd.f32 %v591, %v719
    %v784 = vadd.f32 %v592, %v720
    %v785 = vadd.f32 %v593, %v721
    %v786 = vadd.f32 %v594, %v722
    %v787 = vadd.f32 %v595, %v723
    %v788 = vadd.f32 %v596, %v724
    %v789 = vadd.f32 %v597, %v725
    %v790 = vadd.f32 %v598, %v726
    %v791 = vadd.f32 %v599, %v727
    %v792 = vadd.f32 %v600, %v728
    %v793 = vadd.f32 %v601, %v729
    %v794 = vadd.f32 %v602, %v730
    %v795 = vadd.f32 %v603, %v731
    %v796 = vadd.f32 %v604, %v732
    %v797 = vadd.f32 %v605, %v733
    %v798 = vadd.f32 %v606, %v734
    %v799 = vadd.f32 %v607, %v735
    %v800 = vadd.f32 %v608, %v736
    %v801 = vadd.f32 %v609, %v737
    %v802 = vadd.f32 %v610, %v738
    %v803 = vadd.f32 %v611, %v739
    %v804 = vadd.f32 %v612, %v740
    %v805 = vadd.f32 %v613, %v741
    %v806 = vadd.f32 %v614, %v742
    %v807 = vadd.f32 %v615, %v743
    %v808 = vadd.f32 %v616, %v744
    %v809 = vadd.f32 %v617, %v745
    %v810 = vadd.f32 %v618, %v746
    %v811 = vadd.f32 %v619, %v747
    %v812 = vadd.f32 %v620, %v748
    %v813 = vadd.f32 %v621, %v749
    %v814 = vadd.f32 %v622, %v750
    %v815 = vadd.f32 %v623, %v751
    %v816 = vadd.f32 %v624, %v752
    %817 = vst [vmem:[#allocation2] sm:$0xff] %v753
    %818 = vst [vmem:[#allocation2 + $0x8] sm:$0xff] %v754
    %819 = vst [vmem:[#allocation2 + $0x10] sm:$0xff] %v755
    %820 = vst [vmem:[#allocation2 + $0x18] sm:$0xff] %v756
    %821 = vst [vmem:[#allocation2 + $0x20] sm:$0xff] %v757
    %822 = vst [vmem:[#allocation2 + $0x28] sm:$0xff] %v758
    %823 = vst [vmem:[#allocation2 + $0x30] sm:$0xff] %v759
    %824 = vst [vmem:[#allocation2 + $0x38] sm:$0xff] %v760
    %825 = vst [vmem:[#allocation2 + $0x40] sm:$0xff] %v761
    %826 = vst [vmem:[#allocation2 + $0x48] sm:$0xff] %v762
    %827 = vst [vmem:[#allocation2 + $0x50] sm:$0xff] %v763
    %828 = vst [vmem:[#allocation2 + $0x58] sm:$0xff] %v764
    %829 = vst [vmem:[#allocation2 + $0x60] sm:$0xff] %v765
    %830 = vst [vmem:[#allocation2 + $0x68] sm:$0xff] %v766
    %831 = vst [vmem:[#allocation2 + $0x70] sm:$0xff] %v767
    %832 = vst [vmem:[#allocation2 + $0x78] sm:$0xff] %v768
    %833 = vst [vmem:[#allocation2 + $0x80] sm:$0xff] %v769
    %834 = vst [vmem:[#allocation2 + $0x88] sm:$0xff] %v770
    %835 = vst [vmem:[#allocation2 + $0x90] sm:$0xff] %v771
    %836 = vst [vmem:[#allocation2 + $0x98] sm:$0xff] %v772
    %837 = vst [vmem:[#allocation2 + $0xa0] sm:$0xff] %v773
    %838 = vst [vmem:[#allocation2 + $0xa8] sm:$0xff] %v774
    %839 = vst [vmem:[#allocation2 + $0xb0] sm:$0xff] %v775
    %840 = vst [vmem:[#allocation2 + $0xb8] sm:$0xff] %v776
    %841 = vst [vmem:[#allocation2 + $0xc0] sm:$0xff] %v777
    %842 = vst [vmem:[#allocation2 + $0xc8] sm:$0xff] %v778
    %843 = vst [vmem:[#allocation2 + $0xd0] sm:$0xff] %v779
    %844 = vst [vmem:[#allocation2 + $0xd8] sm:$0xff] %v780
    %845 = vst [vmem:[#allocation2 + $0xe0] sm:$0xff] %v781
    %846 = vst [vmem:[#allocation2 + $0xe8] sm:$0xff] %v782
    %847 = vst [vmem:[#allocation2 + $0xf0] sm:$0xff] %v783
    %848 = vst [vmem:[#allocation2 + $0xf8] sm:$0xff] %v784
    %849 = vst [vmem:[#allocation2 + $0x100] sm:$0xff] %v785
    %850 = vst [vmem:[#allocation2 + $0x108] sm:$0xff] %v786
    %851 = vst [vmem:[#allocation2 + $0x110] sm:$0xff] %v787
    %852 = vst [vmem:[#allocation2 + $0x118] sm:$0xff] %v788
    %853 = vst [vmem:[#allocation2 + $0x120] sm:$0xff] %v789
    %854 = vst [vmem:[#allocation2 + $0x128] sm:$0xff] %v790
    %855 = vst [vmem:[#allocation2 + $0x130] sm:$0xff] %v791
    %856 = vst [vmem:[#allocation2 + $0x138] sm:$0xff] %v792
    %857 = vst [vmem:[#allocation2 + $0x140] sm:$0xff] %v793
    %858 = vst [vmem:[#allocation2 + $0x148] sm:$0xff] %v794
    %859 = vst [vmem:[#allocation2 + $0x150] sm:$0xff] %v795
    %860 = vst [vmem:[#allocation2 + $0x158] sm:$0xff] %v796
    %861 = vst [vmem:[#allocation2 + $0x160] sm:$0xff] %v797
    %862 = vst [vmem:[#allocation2 + $0x168] sm:$0xff] %v798
    %863 = vst [vmem:[#allocation2 + $0x170] sm:$0xff] %v799
    %864 = vst [vmem:[#allocation2 + $0x178] sm:$0xff] %v800
    %865 = vst [vmem:[#allocation2 + $0x180] sm:$0xff] %v801
    %866 = vst [vmem:[#allocation2 + $0x188] sm:$0xff] %v802
    %867 = vst [vmem:[#allocation2 + $0x190] sm:$0xff] %v803
    %868 = vst [vmem:[#allocation2 + $0x198] sm:$0xff] %v804
    %869 = vst [vmem:[#allocation2 + $0x1a0] sm:$0xff] %v805
    %870 = vst [vmem:[#allocation2 + $0x1a8] sm:$0xff] %v806
    %871 = vst [vmem:[#allocation2 + $0x1b0] sm:$0xff] %v807
    %872 = vst [vmem:[#allocation2 + $0x1b8] sm:$0xff] %v808
    %873 = vst [vmem:[#allocation2 + $0x1c0] sm:$0xff] %v809
    %874 = vst [vmem:[#allocation2 + $0x1c8] sm:$0xff] %v810
    %875 = vst [vmem:[#allocation2 + $0x1d0] sm:$0xff] %v811
    %876 = vst [vmem:[#allocation2 + $0x1d8] sm:$0xff] %v812
    %877 = vst [vmem:[#allocation2 + $0x1e0] sm:$0xff] %v813
    %878 = vst [vmem:[#allocation2 + $0x1e8] sm:$0xff] %v814
    %879 = vst [vmem:[#allocation2 + $0x1f0] sm:$0xff] %v815
    %880 = vst [vmem:[#allocation2 + $0x1f8] sm:$0xff] %v816
    // Predicated region
    $region14: #{tpu_custom_call.1} parent=1 // pred_check
      %p881 = pneg %p39
    $region15: #{tpu_custom_call.1} parent=1 // pred_check_branch
      %883 = sbr.rel (%p881) target = $region17
    $region16: #{tpu_custom_call.1} parent=1 // pred_region
      %v884 = vld [vmem:[#allocation2] sm:$0xff]
      %v885 = vld [vmem:[#allocation2 + $0x8] sm:$0xff]
      %v886 = vld [vmem:[#allocation2 + $0x10] sm:$0xff]
      %v887 = vld [vmem:[#allocation2 + $0x18] sm:$0xff]
      %v888 = vld [vmem:[#allocation2 + $0x20] sm:$0xff]
      %v889 = vld [vmem:[#allocation2 + $0x28] sm:$0xff]
      %v890 = vld [vmem:[#allocation2 + $0x30] sm:$0xff]
      %v891 = vld [vmem:[#allocation2 + $0x38] sm:$0xff]
      %v892 = vld [vmem:[#allocation2 + $0x40] sm:$0xff]
      %v893 = vld [vmem:[#allocation2 + $0x48] sm:$0xff]
      %v894 = vld [vmem:[#allocation2 + $0x50] sm:$0xff]
      %v895 = vld [vmem:[#allocation2 + $0x58] sm:$0xff]
      %v896 = vld [vmem:[#allocation2 + $0x60] sm:$0xff]
      %v897 = vld [vmem:[#allocation2 + $0x68] sm:$0xff]
      %v898 = vld [vmem:[#allocation2 + $0x70] sm:$0xff]
      %v899 = vld [vmem:[#allocation2 + $0x78] sm:$0xff]
      %v900 = vld [vmem:[#allocation2 + $0x80] sm:$0xff]
      %v901 = vld [vmem:[#allocation2 + $0x88] sm:$0xff]
      %v902 = vld [vmem:[#allocation2 + $0x90] sm:$0xff]
      %v903 = vld [vmem:[#allocation2 + $0x98] sm:$0xff]
      %v904 = vld [vmem:[#allocation2 + $0xa0] sm:$0xff]
      %v905 = vld [vmem:[#allocation2 + $0xa8] sm:$0xff]
      %v906 = vld [vmem:[#allocation2 + $0xb0] sm:$0xff]
      %v907 = vld [vmem:[#allocation2 + $0xb8] sm:$0xff]
      %v908 = vld [vmem:[#allocation2 + $0xc0] sm:$0xff]
      %v909 = vld [vmem:[#allocation2 + $0xc8] sm:$0xff]
      %v910 = vld [vmem:[#allocation2 + $0xd0] sm:$0xff]
      %v911 = vld [vmem:[#allocation2 + $0xd8] sm:$0xff]
      %v912 = vld [vmem:[#allocation2 + $0xe0] sm:$0xff]
      %v913 = vld [vmem:[#allocation2 + $0xe8] sm:$0xff]
      %v914 = vld [vmem:[#allocation2 + $0xf0] sm:$0xff]
      %v915 = vld [vmem:[#allocation2 + $0xf8] sm:$0xff]
      %v916 = vld [vmem:[#allocation2 + $0x100] sm:$0xff]
      %v917 = vld [vmem:[#allocation2 + $0x108] sm:$0xff]
      %v918 = vld [vmem:[#allocation2 + $0x110] sm:$0xff]
      %v919 = vld [vmem:[#allocation2 + $0x118] sm:$0xff]
      %v920 = vld [vmem:[#allocation2 + $0x120] sm:$0xff]
      %v921 = vld [vmem:[#allocation2 + $0x128] sm:$0xff]
      %v922 = vld [vmem:[#allocation2 + $0x130] sm:$0xff]
      %v923 = vld [vmem:[#allocation2 + $0x138] sm:$0xff]
      %v924 = vld [vmem:[#allocation2 + $0x140] sm:$0xff]
      %v925 = vld [vmem:[#allocation2 + $0x148] sm:$0xff]
      %v926 = vld [vmem:[#allocation2 + $0x150] sm:$0xff]
      %v927 = vld [vmem:[#allocation2 + $0x158] sm:$0xff]
      %v928 = vld [vmem:[#allocation2 + $0x160] sm:$0xff]
      %v929 = vld [vmem:[#allocation2 + $0x168] sm:$0xff]
      %v930 = vld [vmem:[#allocation2 + $0x170] sm:$0xff]
      %v931 = vld [vmem:[#allocation2 + $0x178] sm:$0xff]
      %v932 = vld [vmem:[#allocation2 + $0x180] sm:$0xff]
      %v933 = vld [vmem:[#allocation2 + $0x188] sm:$0xff]
      %v934 = vld [vmem:[#allocation2 + $0x190] sm:$0xff]
      %v935 = vld [vmem:[#allocation2 + $0x198] sm:$0xff]
      %v936 = vld [vmem:[#allocation2 + $0x1a0] sm:$0xff]
      %v937 = vld [vmem:[#allocation2 + $0x1a8] sm:$0xff]
      %v938 = vld [vmem:[#allocation2 + $0x1b0] sm:$0xff]
      %v939 = vld [vmem:[#allocation2 + $0x1b8] sm:$0xff]
      %v940 = vld [vmem:[#allocation2 + $0x1c0] sm:$0xff]
      %v941 = vld [vmem:[#allocation2 + $0x1c8] sm:$0xff]
      %v942 = vld [vmem:[#allocation2 + $0x1d0] sm:$0xff]
      %v943 = vld [vmem:[#allocation2 + $0x1d8] sm:$0xff]
      %v944 = vld [vmem:[#allocation2 + $0x1e0] sm:$0xff]
      %v945 = vld [vmem:[#allocation2 + $0x1e8] sm:$0xff]
      %v946 = vld [vmem:[#allocation2 + $0x1f0] sm:$0xff]
      %v947 = vld [vmem:[#allocation2 + $0x1f8] sm:$0xff]
      %v948 = vadd.f32 %v884, %v885
      %v949 = vadd.f32 %v948, %v886
      %v950 = vadd.f32 %v949, %v887
      %v951 = vadd.f32 %v950, %v888
      %v952 = vadd.f32 %v951, %v889
      %v953 = vadd.f32 %v952, %v890
      %v954 = vadd.f32 %v953, %v891
      %v955 = vadd.f32 %v954, %v892
      %v956 = vadd.f32 %v955, %v893
      %v957 = vadd.f32 %v956, %v894
      %v958 = vadd.f32 %v957, %v895
      %v959 = vadd.f32 %v958, %v896
      %v960 = vadd.f32 %v959, %v897
      %v961 = vadd.f32 %v960, %v898
      %v962 = vadd.f32 %v961, %v899
      %v963 = vadd.f32 %v962, %v900
      %v964 = vadd.f32 %v963, %v901
      %v965 = vadd.f32 %v964, %v902
      %v966 = vadd.f32 %v965, %v903
      %v967 = vadd.f32 %v966, %v904
      %v968 = vadd.f32 %v967, %v905
      %v969 = vadd.f32 %v968, %v906
      %v970 = vadd.f32 %v969, %v907
      %v971 = vadd.f32 %v970, %v908
      %v972 = vadd.f32 %v971, %v909
      %v973 = vadd.f32 %v972, %v910
      %v974 = vadd.f32 %v973, %v911
      %v975 = vadd.f32 %v974, %v912
      %v976 = vadd.f32 %v975, %v913
      %v977 = vadd.f32 %v976, %v914
      %v978 = vadd.f32 %v977, %v915
      %v979 = vadd.f32 %v978, %v916
      %v980 = vadd.f32 %v979, %v917
      %v981 = vadd.f32 %v980, %v918
      %v982 = vadd.f32 %v981, %v919
      %v983 = vadd.f32 %v982, %v920
      %v984 = vadd.f32 %v983, %v921
      %v985 = vadd.f32 %v984, %v922
      %v986 = vadd.f32 %v985, %v923
      %v987 = vadd.f32 %v986, %v924
      %v988 = vadd.f32 %v987, %v925
      %v989 = vadd.f32 %v988, %v926
      %v990 = vadd.f32 %v989, %v927
      %v991 = vadd.f32 %v990, %v928
      %v992 = vadd.f32 %v991, %v929
      %v993 = vadd.f32 %v992, %v930
      %v994 = vadd.f32 %v993, %v931
      %v995 = vadd.f32 %v994, %v932
      %v996 = vadd.f32 %v995, %v933
      %v997 = vadd.f32 %v996, %v934
      %v998 = vadd.f32 %v997, %v935
      %v999 = vadd.f32 %v998, %v936
      %v1000 = vadd.f32 %v999, %v937
      %v1001 = vadd.f32 %v1000, %v938
      %v1002 = vadd.f32 %v1001, %v939
      %v1003 = vadd.f32 %v1002, %v940
      %v1004 = vadd.f32 %v1003, %v941
      %v1005 = vadd.f32 %v1004, %v942
      %v1006 = vadd.f32 %v1005, %v943
      %v1007 = vadd.f32 %v1006, %v944
      %v1008 = vadd.f32 %v1007, %v945
      %v1009 = vadd.f32 %v1008, %v946
      %v1010 = vadd.f32 %v1009, %v947
      %v1011 = vrot.slane %v1010, 4
      %v1012 = vadd.f32 %v1010, %v1011
      %v1013 = vrot.slane %v1012, 2
      %v1014 = vadd.f32 %v1012, %v1013
      %v1015 = vrot.slane %v1014, 1
      %v1016 = vadd.f32 %v1014, %v1015
      %1017 = vst [vmem:[#allocation6] sm:$0x1] %v1016
    $region17: #{tpu_custom_call.1} parent=1 // pred_fallthru
      _
    // Predicated region
    $region18: #{tpu_custom_call.1} parent=1 // pred_check
      _
    $region19: #{tpu_custom_call.1} parent=1 // pred_check_branch
      %1019 = sbr.rel (0) target = $region21
    $region20: #{tpu_custom_call.1} parent=1 // pred_region
      %s1021 = ssub.s32 16, 16
      %1022 = vsyncadd [#allocation5], %s1021
      %s1024 = sshll.u32 [#allocation6], 4
      %s1025 = int_to_ptr.vmem [resolvable:$true] %s1024
      %1027 = dma.vmem_to_hbm [thread:$0]  %s1025, 16, %s1, [#allocation5]
    $region21: #{tpu_custom_call.1} parent=1 // pred_fallthru
      _
    // Predicated region
    $region22: #{tpu_custom_call.1} parent=1 // pred_check
      _
    $region23: #{tpu_custom_call.1} parent=1 // pred_check_branch
      %1029 = sbr.rel (0) target = $region25
    $region24: #{tpu_custom_call.1} parent=1 // pred_region
      %1030 = dma.done [#allocation5], 16
    $region25: #{tpu_custom_call.1} parent=1 // pred_fallthru
      _
    %1031 = vsyncpa [#allocation4], 1
    %1032 = vsyncpa [#allocation5], 1

</llo_original>
